<compile_context>
chip_gen: v5e
topology: v5e:2x2
jax: 0.10.0
libtpu: 0.0.40
codegen_flags: <defaults>
</compile_context>

<pallas_src>
import jax
import jax.numpy as jnp
from jax import lax
from jax.experimental import pallas as pl
from jax.experimental.pallas import tpu as pltpu

EPS = 1e-5
NEG_SLOPE = 0.1


def _leaky(x):
    return jnp.where(x >= 0, x, NEG_SLOPE * x)


def _ccnn_kernel(x_ref, w1_ref, g1_ref, b1_ref, w2_ref, g2_ref, b2_ref,
                 out_ref):
    """Whole forward hot path in one kernel invocation (shapes are small).

    x_ref   : VMEM (H, B*W)        f32, batch folded into the lane axis
    w1_ref  : SMEM (2, 2)          conv1 weight (out_ch, kh), in_ch==1, kw==1
    g1_ref  : SMEM (2,)            bn1 gamma
    b1_ref  : SMEM (2,)            bn1 beta
    w2_ref  : SMEM (2, 3)          conv2 weight (in_ch, kh), out_ch==1, kw==1
    g2_ref  : SMEM (1,)            bn2 gamma
    b2_ref  : SMEM (1,)            bn2 beta
    out_ref : VMEM (H-3, B*W)      f32
    """
    x = x_ref[...]                         # (H, BW) — single resident load
    H, BW = x.shape
    H1 = H - 1                             # after [2,1] valid conv
    H2 = H1 - 2                            # after [3,1] valid conv

    inv_n1 = 1.0 / float(H1 * BW)
    inv_n2 = 1.0 / float(H2 * BW)

    # ---- conv1 (1 -> 2 ch) + bn1 (batch stats, folded) + leaky_relu --------
    acts = []
    for k in range(2):
        # first tap initializes the accumulator (no zeros materialized)
        y = w1_ref[k, 0] * x[0:H1, :]
        y = y + w1_ref[k, 1] * x[1:H1 + 1, :]
        # single-pass statistics: mean and E[y^2]
        s = jnp.sum(y)
        sq = jnp.sum(y * y)
        mean = s * inv_n1
        var = sq * inv_n1 - mean * mean            # biased variance
        scale = g1_ref[k] * lax.rsqrt(var + EPS)   # EUP rsqrt, no divide
        shift = b1_ref[k] - mean * scale
        acts.append(_leaky(y * scale + shift))

    # ---- conv2 (2 -> 1 ch) + bn2 (batch stats, folded) + leaky_relu --------
    z = w2_ref[0, 0] * acts[0][0:H2, :]
    for i in range(1, 3):
        z = z + w2_ref[0, i] * acts[0][i:i + H2, :]
    for i in range(3):
        z = z + w2_ref[1, i] * acts[1][i:i + H2, :]
    s = jnp.sum(z)
    sq = jnp.sum(z * z)
    mean = s * inv_n2
    var = sq * inv_n2 - mean * mean
    scale = g2_ref[0] * lax.rsqrt(var + EPS)
    shift = b2_ref[0] - mean * scale
    out_ref[...] = _leaky(z * scale + shift)


def longitudinal_ccnn_forward(inputs, params, clinical_f_n):
    """inputs: (B, 1, H, W_total) NCHW float32.  Returns (clinical, x)."""
    clinical = inputs[:, 0, 0, :clinical_f_n]              # (B, clinical_f_n)
    mri = inputs[:, 0, :, clinical_f_n:]                   # (B, H, W)
    B, H, W = mri.shape
    H_out = H - 3                                          # 16 -> 15 -> 13
    BW = B * W

    # Lane-dense layout: conv axis H on sublanes, batch*W on lanes.
    x2d = jnp.transpose(mri, (1, 0, 2)).reshape(H, BW)

    vmem = pl.BlockSpec(memory_space=pltpu.MemorySpace.VMEM)
    smem = pl.BlockSpec(memory_space=pltpu.MemorySpace.SMEM)

    n1 = (H - 1) * BW
    n2 = H_out * BW
    cost = pl.CostEstimate(
        flops=2 * (2 * 2) * n1 + 2 * (2 * 3) * n2 + 8 * (2 * n1 + n2),
        transcendentals=3,
        bytes_accessed=4 * (H * BW + H_out * BW),
    )

    out2d = pl.pallas_call(
        _ccnn_kernel,
        out_shape=jax.ShapeDtypeStruct((H_out, BW), jnp.float32),
        in_specs=[vmem, smem, smem, smem, smem, smem, smem],
        out_specs=vmem,
        cost_estimate=cost,
    )(x2d,
      params["w1"], params["g1"], params["b1"],
      params["w2"], params["g2"], params["b2"])

    # Back to NCHW (B, 1, H-3, W).
    x = jnp.transpose(out2d.reshape(H_out, B, W), (1, 0, 2))[:, None, :, :]
    return clinical, x


# ---------------------------------------------------------------------------
# Pure-JAX reference (same math via lax.conv) for a correctness check.
# ---------------------------------------------------------------------------
def _reference(inputs, params, clinical_f_n):
    dn = ("NCHW", "OIHW", "NCHW")
    x = inputs[:, :, :, clinical_f_n:]
    w1 = params["w1"][:, None, :, None]                    # (2,1,2,1)
    y = lax.conv_general_dilated(x, w1, (1, 1), "VALID", dimension_numbers=dn)
    m = y.mean(axis=(0, 2, 3), keepdims=True)
    v = y.var(axis=(0, 2, 3), keepdims=True)
    y = (y - m) / jnp.sqrt(v + EPS)
    y = y * params["g1"][None, :, None, None] + params["b1"][None, :, None, None]
    y = _leaky(y)
    w2 = params["w2"][None, :, :, None]                    # (1,2,3,1)
    z = lax.conv_general_dilated(y, w2, (1, 1), "VALID", dimension_numbers=dn)
    m = z.mean(axis=(0, 2, 3), keepdims=True)
    v = z.var(axis=(0, 2, 3), keepdims=True)
    z = (z - m) / jnp.sqrt(v + EPS)
    z = z * params["g2"][None, :, None, None] + params["b2"][None, :, None, None]
    z = _leaky(z)
    return inputs[:, 0, 0, :clinical_f_n], z


if __name__ == "__main__":
    key = jax.random.PRNGKey(0)
    k_in, k_w1, k_w2 = jax.random.split(key, 3)

    B, H = 2, 16
    clinical_f_n = 4
    W_mri = 16
    W_total = clinical_f_n + W_mri

    inputs = jax.random.normal(k_in, (B, 1, H, W_total), dtype=jnp.float32)

    # Deterministic synthetic parameters (shapes from the module __init__).
    params = {
        "w1": 0.25 * jax.random.normal(k_w1, (2, 2), dtype=jnp.float32),  # conv1 (2,1,2,1) squeezed
        "g1": jnp.array([1.0, 0.9], dtype=jnp.float32),                   # bn1 gamma
        "b1": jnp.array([0.05, -0.05], dtype=jnp.float32),                # bn1 beta
        "w2": 0.25 * jax.random.normal(k_w2, (2, 3), dtype=jnp.float32),  # conv2 (1,2,3,1) squeezed
        "g2": jnp.array([1.1], dtype=jnp.float32),                        # bn2 gamma
        "b2": jnp.array([0.02], dtype=jnp.float32),                       # bn2 beta
    }

    clinical, x = longitudinal_ccnn_forward(inputs, params, clinical_f_n)
    jax.block_until_ready((clinical, x))

    clinical_ref, x_ref = _reference(inputs, params, clinical_f_n)
    assert clinical.shape == (B, clinical_f_n)
    assert x.shape == (B, 1, H - 3, W_mri)
    assert jnp.allclose(clinical, clinical_ref, atol=1e-5, rtol=1e-5)
    assert jnp.allclose(x, x_ref, atol=1e-4, rtol=1e-4)

    print("KERNEL_OK")
</pallas_src>

<mosaic_0001>
module attributes {stable_mosaic.version = 11 : i64} {
  func.func @_ccnn_kernel(%arg0: memref<16x32xf32, #tpu.memory_space<vmem>>, %arg1: memref<2x2xf32, #tpu.memory_space<smem>>, %arg2: memref<2xf32, #tpu.memory_space<smem>>, %arg3: memref<2xf32, #tpu.memory_space<smem>>, %arg4: memref<2x3xf32, #tpu.memory_space<smem>>, %arg5: memref<1xf32, #tpu.memory_space<smem>>, %arg6: memref<1xf32, #tpu.memory_space<smem>>, %arg7: memref<13x32xf32, #tpu.memory_space<vmem>>) attributes {dimension_semantics = [], scalar_prefetch = 0 : i64, scratch_operands = 0 : i64, tpu.core_type = #tpu.core_type<tc>} {
    %c0 = arith.constant 0 : index
    %c0_0 = arith.constant 0 : index
    %0 = vector.load %arg0[%c0, %c0_0] : memref<16x32xf32, #tpu.memory_space<vmem>>, vector<16x32xf32>
    %c0_1 = arith.constant 0 : index
    %c0_2 = arith.constant 0 : index
    %1 = memref.load %arg1[%c0_1, %c0_2] : memref<2x2xf32, #tpu.memory_space<smem>>
    %2 = vector.extract_strided_slice %0 {offsets = [0, 0], sizes = [15, 32], strides = [1, 1]} : vector<16x32xf32> to vector<15x32xf32>
    %3 = vector.broadcast %1 : f32 to vector<15x32xf32>
    %4 = arith.mulf %3, %2 : vector<15x32xf32>
    %c0_3 = arith.constant 0 : index
    %c1 = arith.constant 1 : index
    %5 = memref.load %arg1[%c0_3, %c1] : memref<2x2xf32, #tpu.memory_space<smem>>
    %6 = vector.extract_strided_slice %0 {offsets = [1, 0], sizes = [15, 32], strides = [1, 1]} : vector<16x32xf32> to vector<15x32xf32>
    %7 = vector.broadcast %5 : f32 to vector<15x32xf32>
    %8 = arith.mulf %7, %6 : vector<15x32xf32>
    %9 = arith.addf %4, %8 : vector<15x32xf32>
    %10 = vector.shape_cast %9 : vector<15x32xf32> to vector<1x15x32xf32>
    %cst = arith.constant dense<0.000000e+00> : vector<1xf32>
    %11 = vector.multi_reduction <add>, %10, %cst [1, 2] : vector<1x15x32xf32> to vector<1xf32>
    %12 = vector.shape_cast %11 : vector<1xf32> to vector<1x1x1xf32>
    %13 = vector.extract %12[0, 0, 0] : f32 from vector<1x1x1xf32>
    %14 = arith.mulf %9, %9 : vector<15x32xf32>
    %15 = vector.shape_cast %14 : vector<15x32xf32> to vector<1x15x32xf32>
    %cst_4 = arith.constant dense<0.000000e+00> : vector<1xf32>
    %16 = vector.multi_reduction <add>, %15, %cst_4 [1, 2] : vector<1x15x32xf32> to vector<1xf32>
    %17 = vector.shape_cast %16 : vector<1xf32> to vector<1x1x1xf32>
    %18 = vector.extract %17[0, 0, 0] : f32 from vector<1x1x1xf32>
    %cst_5 = arith.constant 0.00208333344 : f32
    %19 = arith.mulf %13, %cst_5 : f32
    %cst_6 = arith.constant 0.00208333344 : f32
    %20 = arith.mulf %18, %cst_6 : f32
    %21 = arith.mulf %19, %19 : f32
    %22 = arith.subf %20, %21 : f32
    %c0_7 = arith.constant 0 : index
    %23 = memref.load %arg2[%c0_7] : memref<2xf32, #tpu.memory_space<smem>>
    %cst_8 = arith.constant 9.99999974E-6 : f32
    %24 = arith.addf %22, %cst_8 : f32
    %25 = math.rsqrt %24 : f32
    %26 = arith.mulf %23, %25 : f32
    %c0_9 = arith.constant 0 : index
    %27 = memref.load %arg3[%c0_9] : memref<2xf32, #tpu.memory_space<smem>>
    %28 = arith.mulf %19, %26 : f32
    %29 = arith.subf %27, %28 : f32
    %30 = vector.broadcast %26 : f32 to vector<15x32xf32>
    %31 = arith.mulf %9, %30 : vector<15x32xf32>
    %32 = vector.broadcast %29 : f32 to vector<15x32xf32>
    %33 = arith.addf %31, %32 : vector<15x32xf32>
    %cst_10 = arith.constant 0.000000e+00 : f32
    %34 = vector.broadcast %cst_10 : f32 to vector<15x32xf32>
    %35 = arith.cmpf oge, %33, %34 : vector<15x32xf32>
    %cst_11 = arith.constant 1.000000e-01 : f32
    %36 = vector.broadcast %cst_11 : f32 to vector<15x32xf32>
    %37 = arith.mulf %36, %33 : vector<15x32xf32>
    %38 = arith.select %35, %33, %37 : vector<15x32xi1>, vector<15x32xf32>
    %c1_12 = arith.constant 1 : index
    %c0_13 = arith.constant 0 : index
    %39 = memref.load %arg1[%c1_12, %c0_13] : memref<2x2xf32, #tpu.memory_space<smem>>
    %40 = vector.extract_strided_slice %0 {offsets = [0, 0], sizes = [15, 32], strides = [1, 1]} : vector<16x32xf32> to vector<15x32xf32>
    %41 = vector.broadcast %39 : f32 to vector<15x32xf32>
    %42 = arith.mulf %41, %40 : vector<15x32xf32>
    %c1_14 = arith.constant 1 : index
    %c1_15 = arith.constant 1 : index
    %43 = memref.load %arg1[%c1_14, %c1_15] : memref<2x2xf32, #tpu.memory_space<smem>>
    %44 = vector.extract_strided_slice %0 {offsets = [1, 0], sizes = [15, 32], strides = [1, 1]} : vector<16x32xf32> to vector<15x32xf32>
    %45 = vector.broadcast %43 : f32 to vector<15x32xf32>
    %46 = arith.mulf %45, %44 : vector<15x32xf32>
    %47 = arith.addf %42, %46 : vector<15x32xf32>
    %48 = vector.shape_cast %47 : vector<15x32xf32> to vector<1x15x32xf32>
    %cst_16 = arith.constant dense<0.000000e+00> : vector<1xf32>
    %49 = vector.multi_reduction <add>, %48, %cst_16 [1, 2] : vector<1x15x32xf32> to vector<1xf32>
    %50 = vector.shape_cast %49 : vector<1xf32> to vector<1x1x1xf32>
    %51 = vector.extract %50[0, 0, 0] : f32 from vector<1x1x1xf32>
    %52 = arith.mulf %47, %47 : vector<15x32xf32>
    %53 = vector.shape_cast %52 : vector<15x32xf32> to vector<1x15x32xf32>
    %cst_17 = arith.constant dense<0.000000e+00> : vector<1xf32>
    %54 = vector.multi_reduction <add>, %53, %cst_17 [1, 2] : vector<1x15x32xf32> to vector<1xf32>
    %55 = vector.shape_cast %54 : vector<1xf32> to vector<1x1x1xf32>
    %56 = vector.extract %55[0, 0, 0] : f32 from vector<1x1x1xf32>
    %cst_18 = arith.constant 0.00208333344 : f32
    %57 = arith.mulf %51, %cst_18 : f32
    %cst_19 = arith.constant 0.00208333344 : f32
    %58 = arith.mulf %56, %cst_19 : f32
    %59 = arith.mulf %57, %57 : f32
    %60 = arith.subf %58, %59 : f32
    %c1_20 = arith.constant 1 : index
    %61 = memref.load %arg2[%c1_20] : memref<2xf32, #tpu.memory_space<smem>>
    %cst_21 = arith.constant 9.99999974E-6 : f32
    %62 = arith.addf %60, %cst_21 : f32
    %63 = math.rsqrt %62 : f32
    %64 = arith.mulf %61, %63 : f32
    %c1_22 = arith.constant 1 : index
    %65 = memref.load %arg3[%c1_22] : memref<2xf32, #tpu.memory_space<smem>>
    %66 = arith.mulf %57, %64 : f32
    %67 = arith.subf %65, %66 : f32
    %68 = vector.broadcast %64 : f32 to vector<15x32xf32>
    %69 = arith.mulf %47, %68 : vector<15x32xf32>
    %70 = vector.broadcast %67 : f32 to vector<15x32xf32>
    %71 = arith.addf %69, %70 : vector<15x32xf32>
    %cst_23 = arith.constant 0.000000e+00 : f32
    %72 = vector.broadcast %cst_23 : f32 to vector<15x32xf32>
    %73 = arith.cmpf oge, %71, %72 : vector<15x32xf32>
    %cst_24 = arith.constant 1.000000e-01 : f32
    %74 = vector.broadcast %cst_24 : f32 to vector<15x32xf32>
    %75 = arith.mulf %74, %71 : vector<15x32xf32>
    %76 = arith.select %73, %71, %75 : vector<15x32xi1>, vector<15x32xf32>
    %c0_25 = arith.constant 0 : index
    %c0_26 = arith.constant 0 : index
    %77 = memref.load %arg4[%c0_25, %c0_26] : memref<2x3xf32, #tpu.memory_space<smem>>
    %78 = vector.extract_strided_slice %38 {offsets = [0, 0], sizes = [13, 32], strides = [1, 1]} : vector<15x32xf32> to vector<13x32xf32>
    %79 = vector.broadcast %77 : f32 to vector<13x32xf32>
    %80 = arith.mulf %79, %78 : vector<13x32xf32>
    %c0_27 = arith.constant 0 : index
    %c1_28 = arith.constant 1 : index
    %81 = memref.load %arg4[%c0_27, %c1_28] : memref<2x3xf32, #tpu.memory_space<smem>>
    %82 = vector.extract_strided_slice %38 {offsets = [1, 0], sizes = [13, 32], strides = [1, 1]} : vector<15x32xf32> to vector<13x32xf32>
    %83 = vector.broadcast %81 : f32 to vector<13x32xf32>
    %84 = arith.mulf %83, %82 : vector<13x32xf32>
    %85 = arith.addf %80, %84 : vector<13x32xf32>
    %c0_29 = arith.constant 0 : index
    %c2 = arith.constant 2 : index
    %86 = memref.load %arg4[%c0_29, %c2] : memref<2x3xf32, #tpu.memory_space<smem>>
    %87 = vector.extract_strided_slice %38 {offsets = [2, 0], sizes = [13, 32], strides = [1, 1]} : vector<15x32xf32> to vector<13x32xf32>
    %88 = vector.broadcast %86 : f32 to vector<13x32xf32>
    %89 = arith.mulf %88, %87 : vector<13x32xf32>
    %90 = arith.addf %85, %89 : vector<13x32xf32>
    %c1_30 = arith.constant 1 : index
    %c0_31 = arith.constant 0 : index
    %91 = memref.load %arg4[%c1_30, %c0_31] : memref<2x3xf32, #tpu.memory_space<smem>>
    %92 = vector.extract_strided_slice %76 {offsets = [0, 0], sizes = [13, 32], strides = [1, 1]} : vector<15x32xf32> to vector<13x32xf32>
    %93 = vector.broadcast %91 : f32 to vector<13x32xf32>
    %94 = arith.mulf %93, %92 : vector<13x32xf32>
    %95 = arith.addf %90, %94 : vector<13x32xf32>
    %c1_32 = arith.constant 1 : index
    %c1_33 = arith.constant 1 : index
    %96 = memref.load %arg4[%c1_32, %c1_33] : memref<2x3xf32, #tpu.memory_space<smem>>
    %97 = vector.extract_strided_slice %76 {offsets = [1, 0], sizes = [13, 32], strides = [1, 1]} : vector<15x32xf32> to vector<13x32xf32>
    %98 = vector.broadcast %96 : f32 to vector<13x32xf32>
    %99 = arith.mulf %98, %97 : vector<13x32xf32>
    %100 = arith.addf %95, %99 : vector<13x32xf32>
    %c1_34 = arith.constant 1 : index
    %c2_35 = arith.constant 2 : index
    %101 = memref.load %arg4[%c1_34, %c2_35] : memref<2x3xf32, #tpu.memory_space<smem>>
    %102 = vector.extract_strided_slice %76 {offsets = [2, 0], sizes = [13, 32], strides = [1, 1]} : vector<15x32xf32> to vector<13x32xf32>
    %103 = vector.broadcast %101 : f32 to vector<13x32xf32>
    %104 = arith.mulf %103, %102 : vector<13x32xf32>
    %105 = arith.addf %100, %104 : vector<13x32xf32>
    %106 = vector.shape_cast %105 : vector<13x32xf32> to vector<1x13x32xf32>
    %cst_36 = arith.constant dense<0.000000e+00> : vector<1xf32>
    %107 = vector.multi_reduction <add>, %106, %cst_36 [1, 2] : vector<1x13x32xf32> to vector<1xf32>
    %108 = vector.shape_cast %107 : vector<1xf32> to vector<1x1x1xf32>
    %109 = vector.extract %108[0, 0, 0] : f32 from vector<1x1x1xf32>
    %110 = arith.mulf %105, %105 : vector<13x32xf32>
    %111 = vector.shape_cast %110 : vector<13x32xf32> to vector<1x13x32xf32>
    %cst_37 = arith.constant dense<0.000000e+00> : vector<1xf32>
    %112 = vector.multi_reduction <add>, %111, %cst_37 [1, 2] : vector<1x13x32xf32> to vector<1xf32>
    %113 = vector.shape_cast %112 : vector<1xf32> to vector<1x1x1xf32>
    %114 = vector.extract %113[0, 0, 0] : f32 from vector<1x1x1xf32>
    %cst_38 = arith.constant 0.00240384624 : f32
    %115 = arith.mulf %109, %cst_38 : f32
    %cst_39 = arith.constant 0.00240384624 : f32
    %116 = arith.mulf %114, %cst_39 : f32
    %117 = arith.mulf %115, %115 : f32
    %118 = arith.subf %116, %117 : f32
    %c0_40 = arith.constant 0 : index
    %119 = memref.load %arg5[%c0_40] : memref<1xf32, #tpu.memory_space<smem>>
    %cst_41 = arith.constant 9.99999974E-6 : f32
    %120 = arith.addf %118, %cst_41 : f32
    %121 = math.rsqrt %120 : f32
    %122 = arith.mulf %119, %121 : f32
    %c0_42 = arith.constant 0 : index
    %123 = memref.load %arg6[%c0_42] : memref<1xf32, #tpu.memory_space<smem>>
    %124 = arith.mulf %115, %122 : f32
    %125 = arith.subf %123, %124 : f32
    %126 = vector.broadcast %122 : f32 to vector<13x32xf32>
    %127 = arith.mulf %105, %126 : vector<13x32xf32>
    %128 = vector.broadcast %125 : f32 to vector<13x32xf32>
    %129 = arith.addf %127, %128 : vector<13x32xf32>
    %cst_43 = arith.constant 0.000000e+00 : f32
    %130 = vector.broadcast %cst_43 : f32 to vector<13x32xf32>
    %131 = arith.cmpf oge, %129, %130 : vector<13x32xf32>
    %cst_44 = arith.constant 1.000000e-01 : f32
    %132 = vector.broadcast %cst_44 : f32 to vector<13x32xf32>
    %133 = arith.mulf %132, %129 : vector<13x32xf32>
    %134 = arith.select %131, %129, %133 : vector<13x32xi1>, vector<13x32xf32>
    %c0_45 = arith.constant 0 : index
    %c0_46 = arith.constant 0 : index
    %135 = vector.load %arg7[%c0_45, %c0_46] : memref<13x32xf32, #tpu.memory_space<vmem>>, vector<13x32xf32>
    tpu.vector_store %arg7[%c0_45, %c0_46], %134 {strides = array<i32>} : memref<13x32xf32, #tpu.memory_space<vmem>>, vector<13x32xf32>,
    return
  }
}

</mosaic_0001>

<llo_original>
// kernel: tpu_custom_call.1
$region0: #{tpu_custom_call.1}
  #allocation0 [shape = 'u32[]', space=smem, size = 0x4, offset = 0x4, fixed_abs, tag = 'smem constant byte address 0x4 - core index']
  #allocation1 [shape = 'u32[72,128]{1,0:T(1,128)}', space=vmem, size = 0x9000, scoped, tag = 'internal scratch']
  #allocation2 [shape = 'f32[1]{0:T(128)S(6)}', space=smem, size = 0x200, scoped, tag = 'scoped memory for tpu_custom_call.1']
  #allocation3 [shape = 'f32[1]{0:T(128)S(6)}', space=smem, size = 0x200, scoped, tag = 'scoped memory for tpu_custom_call.1']
  %s0 = inlined_call_operand.hbm [shape: f32[16,32], index: 0, kind: input, shape index: {}]
  %s1 = inlined_call_operand.vmem [shape: f32[2,2], index: 1, kind: input, shape index: {}]
  %s2 = inlined_call_operand.vmem [shape: f32[2], index: 2, kind: input, shape index: {}]
  %s3 = inlined_call_operand.vmem [shape: f32[2], index: 3, kind: input, shape index: {}]
  %s4 = inlined_call_operand.vmem [shape: f32[2,3], index: 4, kind: input, shape index: {}]
  %s5 = inlined_call_operand.<no memory space> [shape: f32[1], index: 5, kind: input, shape index: {}]
  %s6 = inlined_call_operand.<no memory space> [shape: f32[1], index: 6, kind: input, shape index: {}]
  %s7 = inlined_call_operand.hbm [shape: f32[13,32], index: 7, kind: output, shape index: {}]
  %s8 = sld [smem:[#allocation0]]
  $region58: #{tpu_custom_call.1} parent=0
    _
  %s10 = ssub.s32 1, %s8
  %s11 = scalar_select 0, %s10, %s8
  %12 = sst [smem:[#allocation2]] %s5
  %13 = sst [smem:[#allocation3]] %s6
  $region1: #{tpu_custom_call.1} parent=0
    #allocation4 [shape = 'u8[8192]{0}', space=vmem, size = 0x2000, scoped, tag = 'input window, operand 0, single buffered']
    #allocation5 [shape = 's32[1]{0}', space=sflag, size = 0x4, scoped, tag = 'scoped memory for tpu_custom_call.1']
    #allocation6 [shape = 's32[1]{0}', space=sflag, size = 0x4, scoped, tag = 'scoped memory for tpu_custom_call.1']
    #allocation7 [shape = 's32[1]{0}', space=sflag, size = 0x4, scoped, tag = 'scoped memory for tpu_custom_call.1']
    #allocation8 [shape = 'u8[1024]{0}', space=smem, size = 0x400, scoped, tag = 'input window, operand 1, single buffered']
    #allocation9 [shape = 'u8[512]{0}', space=smem, size = 0x200, scoped, tag = 'input window, operand 2, single buffered']
    #allocation10 [shape = 's32[1]{0}', space=sflag, size = 0x4, scoped, tag = 'scoped memory for tpu_custom_call.1']
    #allocation11 [shape = 'u8[512]{0}', space=smem, size = 0x200, scoped, tag = 'input window, operand 3, single buffered']
    #allocation12 [shape = 'u8[1024]{0}', space=smem, size = 0x400, scoped, tag = 'input window, operand 4, single buffered']
    #allocation13 [shape = 's32[1]{0}', space=sflag, size = 0x4, scoped, tag = 'scoped memory for tpu_custom_call.1']
    #allocation14 [shape = 'u8[8192]{0}', space=vmem, size = 0x2000, scoped, tag = 'output window, operand 0, single buffered']
    %14 = vsyncpa [#allocation5], 0
    %15 = vsyncpa [#allocation7], 0
    %16 = vsyncpa [#allocation10], 0
    %17 = vsyncpa [#allocation13], 0
    %18 = vsyncpa [#allocation6], 0
    // Predicated region
    $region2: #{tpu_custom_call.1} parent=1 // pred_check
      _
    $region3: #{tpu_custom_call.1} parent=1 // pred_check_branch
      %20 = sbr.rel (0) target = $region5
    $region4: #{tpu_custom_call.1} parent=1 // pred_region
      %22 = vsyncadd [#allocation5], 0
      %s23 = sshll.u32 %s0, 4
      %s24 = int_to_ptr.hbm [resolvable:$true] %s23
      %s25 = sshll.u32 [#allocation4], 4
      %s26 = int_to_ptr.vmem [resolvable:$true] %s25
      %31 = dma.hbm_to_vmem [thread:$0]  %s24, 256, %s26, [#allocation5], 128, 128, 8
    $region5: #{tpu_custom_call.1} parent=1 // pred_fallthru
      _
    // Predicated region
    $region6: #{tpu_custom_call.1} parent=1 // pred_check
      _
    $region7: #{tpu_custom_call.1} parent=1 // pred_check_branch
      %33 = sbr.rel (0) target = $region9
    $region8: #{tpu_custom_call.1} parent=1 // pred_region
      %35 = vsyncadd [#allocation7], 0
      %s37 = sshll.u32 %s1, 4
      %s38 = int_to_ptr.vmem [resolvable:$true] %s37
      %40 = dma.vmem_to_smem %s38, 32, [#allocation8], [#allocation7]
    $region9: #{tpu_custom_call.1} parent=1 // pred_fallthru
      _
    // Predicated region
    $region10: #{tpu_custom_call.1} parent=1 // pred_check
      _
    $region11: #{tpu_custom_call.1} parent=1 // pred_check_branch
      %42 = sbr.rel (0) target = $region13
    $region12: #{tpu_custom_call.1} parent=1 // pred_region
      %44 = vsyncadd [#allocation10], 0
      %s46 = sshll.u32 %s2, 4
      %s47 = int_to_ptr.vmem [resolvable:$true] %s46
      %49 = dma.vmem_to_smem %s47, 16, [#allocation9], [#allocation10]
    $region13: #{tpu_custom_call.1} parent=1 // pred_fallthru
      _
    // Predicated region
    $region14: #{tpu_custom_call.1} parent=1 // pred_check
      _
    $region15: #{tpu_custom_call.1} parent=1 // pred_check_branch
      %51 = sbr.rel (0) target = $region17
    $region16: #{tpu_custom_call.1} parent=1 // pred_region
      %53 = vsyncadd [#allocation10], 0
      %s55 = sshll.u32 %s3, 4
      %s56 = int_to_ptr.vmem [resolvable:$true] %s55
      %58 = dma.vmem_to_smem %s56, 16, [#allocation11], [#allocation10]
    $region17: #{tpu_custom_call.1} parent=1 // pred_fallthru
      _
    // Predicated region
    $region18: #{tpu_custom_call.1} parent=1 // pred_check
      _
    $region19: #{tpu_custom_call.1} parent=1 // pred_check_branch
      %60 = sbr.rel (0) target = $region21
    $region20: #{tpu_custom_call.1} parent=1 // pred_region
      %62 = vsyncadd [#allocation13], 0
      %s64 = sshll.u32 %s4, 4
      %s65 = int_to_ptr.vmem [resolvable:$true] %s64
      %67 = dma.vmem_to_smem %s65, 32, [#allocation12], [#allocation13]
    $region21: #{tpu_custom_call.1} parent=1 // pred_fallthru
      _
    // Predicated region
    $region22: #{tpu_custom_call.1} parent=1 // pred_check
      _
    $region23: #{tpu_custom_call.1} parent=1 // pred_check_branch
      %69 = sbr.rel (0) target = $region25
    $region24: #{tpu_custom_call.1} parent=1 // pred_region
      _
    $region25: #{tpu_custom_call.1} parent=1 // pred_fallthru
      _
    // Predicated region
    $region26: #{tpu_custom_call.1} parent=1 // pred_check
      _
    $region27: #{tpu_custom_call.1} parent=1 // pred_check_branch
      %71 = sbr.rel (0) target = $region29
    $region28: #{tpu_custom_call.1} parent=1 // pred_region
      _
    $region29: #{tpu_custom_call.1} parent=1 // pred_fallthru
      _
    // Predicated region
    $region30: #{tpu_custom_call.1} parent=1 // pred_check
      _
    $region31: #{tpu_custom_call.1} parent=1 // pred_check_branch
      %73 = sbr.rel (0) target = $region33
    $region32: #{tpu_custom_call.1} parent=1 // pred_region
      %75 = dma.done [#allocation5], 256
    $region33: #{tpu_custom_call.1} parent=1 // pred_fallthru
      _
    // Predicated region
    $region34: #{tpu_custom_call.1} parent=1 // pred_check
      _
    $region35: #{tpu_custom_call.1} parent=1 // pred_check_branch
      %77 = sbr.rel (0) target = $region37
    $region36: #{tpu_custom_call.1} parent=1 // pred_region
      %79 = dma.done [#allocation7], 32
    $region37: #{tpu_custom_call.1} parent=1 // pred_fallthru
      _
    // Predicated region
    $region38: #{tpu_custom_call.1} parent=1 // pred_check
      _
    $region39: #{tpu_custom_call.1} parent=1 // pred_check_branch
      %81 = sbr.rel (0) target = $region41
    $region40: #{tpu_custom_call.1} parent=1 // pred_region
      %83 = dma.done [#allocation10], 16
    $region41: #{tpu_custom_call.1} parent=1 // pred_fallthru
      _
    // Predicated region
    $region42: #{tpu_custom_call.1} parent=1 // pred_check
      _
    $region43: #{tpu_custom_call.1} parent=1 // pred_check_branch
      %85 = sbr.rel (0) target = $region45
    $region44: #{tpu_custom_call.1} parent=1 // pred_region
      %87 = dma.done [#allocation10], 16
    $region45: #{tpu_custom_call.1} parent=1 // pred_fallthru
      _
    // Predicated region
    $region46: #{tpu_custom_call.1} parent=1 // pred_check
      _
    $region47: #{tpu_custom_call.1} parent=1 // pred_check_branch
      %89 = sbr.rel (0) target = $region49
    $region48: #{tpu_custom_call.1} parent=1 // pred_region
      %91 = dma.done [#allocation13], 32
    $region49: #{tpu_custom_call.1} parent=1 // pred_fallthru
      _
    %92 = sfence
    %v93 = vld [vmem:[#allocation4] sm:$0xff]
    %v94 = vld [vmem:[#allocation4 + $0x8] sm:$0xff]
    %s95 = sld [smem:[#allocation8]]
    %v96 = vstv %s95
    %v97 = vmul.f32 %v96, %v93
    %v98 = vmul.f32 %v96, %v94
    %s99 = sld [smem:[#allocation8 + $0x1]]
    %v100 = vstv %s99
    %v101 = vmul.f32 %v100, %v93
    %v102 = vmul.f32 %v100, %v94
    %vm105 = vcmask 1046528
    %v106 = vrot.slane %v101, 1
    %v107 = vrot.slane %v102, 1
    %v108 = vsel %vm105, %v106, %v107
    %v111 = vadd.f32 %v97, %v108
    %v112 = vadd.f32 %v98, %v107
    %vm113 = vcmask 261120
    %v114 = vsel %vm113, %v111, 0.0
    %vm115 = vcmask 260096
    %v116 = vsel %vm115, %v112, 0.0
    %v117 = vadd.f32 %v114, %v116
    %118 = vadd.xlane.f32.xlu0 %v117
    %v119 = vpop.xlane.xlu0 %118
    %v120 = vrot.slane %v119, 4
    %v121 = vadd.f32 %v119, %v120
    %v122 = vrot.slane %v121, 2
    %v123 = vadd.f32 %v121, %v122
    %v124 = vrot.slane %v123, 1
    %v125 = vadd.f32 %v123, %v124
    %s126 = vtos %v125
    %v127 = vmul.f32 %v111, %v111
    %v128 = vmul.f32 %v112, %v112
    %v129 = vsel %vm113, %v127, 0.0
    %v130 = vsel %vm115, %v128, 0.0
    %v131 = vadd.f32 %v129, %v130
    %132 = vadd.xlane.f32.xlu0 %v131
    %v133 = vpop.xlane.xlu0 %132
    %v134 = vrot.slane %v133, 4
    %v135 = vadd.f32 %v133, %v134
    %v136 = vrot.slane %v135, 2
    %v137 = vadd.f32 %v135, %v136
    %v138 = vrot.slane %v137, 1
    %v139 = vadd.f32 %v137, %v138
    %s140 = vtos %v139
    %s141 = smul.f32 %s126, 0.0020833334
    %s142 = smul.f32 %s140, 0.0020833334
    %s143 = smul.f32 %s141, %s141
    %s144 = ssub.f32 %s142, %s143
    %s145 = sld [smem:[#allocation9]]
    %s146 = sadd.f32 %s144, 1e-05
    %v147 = vstv %s146
    %v148 = vrsqrt.pop %v147
    %v149 = vmul.f32 %v148, %v147
    %v150 = vmul.f32 %v149, %v148
    %v151 = vmul.f32 0.5, %v150
    %v152 = vsub.f32 1.5, %v151
    %v153 = vmul.f32 %v148, %v152
    %vm154 = vweird.f32 %v147
    %vm155 = vweird.f32 %v148
    %vm156 = vmor %vm154, %vm155
    %v157 = vsel %vm156, %v148, %v153
    %s158 = vtos %v157
    %s159 = smul.f32 %s145, %s158
    %s160 = sld [smem:[#allocation11]]
    %s161 = smul.f32 %s141, %s159
    %s162 = ssub.f32 %s160, %s161
    %v163 = vstv %s159
    %v164 = vmul.f32 %v111, %v163
    %v165 = vmul.f32 %v112, %v163
    %v166 = vstv %s162
    %v167 = vadd.f32 %v164, %v166
    %v168 = vadd.f32 %v165, %v166
    %vm169 = vcmp.ge.f32.partialorder %v167, 0.0
    %vm170 = vcmp.ge.f32.partialorder %v168, 0.0
    %v171 = vmul.f32 %v167, 0.1
    %v172 = vmul.f32 %v168, 0.1
    %v173 = vsel %vm169, %v167, %v171
    %v174 = vsel %vm170, %v168, %v172
    %s175 = sld [smem:[#allocation8 + $0x80]]
    %v176 = vstv %s175
    %v177 = vmul.f32 %v176, %v93
    %v178 = vmul.f32 %v176, %v94
    %s179 = sld [smem:[#allocation8 + $0x81]]
    %v180 = vstv %s179
    %v181 = vmul.f32 %v180, %v93
    %v182 = vmul.f32 %v180, %v94
    %v185 = vrot.slane %v181, 1
    %v186 = vrot.slane %v182, 1
    %v187 = vsel %vm105, %v185, %v186
    %v190 = vadd.f32 %v177, %v187
    %v191 = vadd.f32 %v178, %v186
    %v192 = vsel %vm113, %v190, 0.0
    %v193 = vsel %vm115, %v191, 0.0
    %v194 = vadd.f32 %v192, %v193
    %195 = vadd.xlane.f32.xlu0 %v194
    %v196 = vpop.xlane.xlu0 %195
    %v197 = vrot.slane %v196, 4
    %v198 = vadd.f32 %v196, %v197
    %v199 = vrot.slane %v198, 2
    %v200 = vadd.f32 %v198, %v199
    %v201 = vrot.slane %v200, 1
    %v202 = vadd.f32 %v200, %v201
    %s203 = vtos %v202
    %v204 = vmul.f32 %v190, %v190
    %v205 = vmul.f32 %v191, %v191
    %v206 = vsel %vm113, %v204, 0.0
    %v207 = vsel %vm115, %v205, 0.0
    %v208 = vadd.f32 %v206, %v207
    %209 = vadd.xlane.f32.xlu0 %v208
    %v210 = vpop.xlane.xlu0 %209
    %v211 = vrot.slane %v210, 4
    %v212 = vadd.f32 %v210, %v211
    %v213 = vrot.slane %v212, 2
    %v214 = vadd.f32 %v212, %v213
    %v215 = vrot.slane %v214, 1
    %v216 = vadd.f32 %v214, %v215
    %s217 = vtos %v216
    %s218 = smul.f32 %s203, 0.0020833334
    %s219 = smul.f32 %s217, 0.0020833334
    %s220 = smul.f32 %s218, %s218
    %s221 = ssub.f32 %s219, %s220
    %s222 = sld [smem:[#allocation9 + $0x1]]
    %s223 = sadd.f32 %s221, 1e-05
    %v224 = vstv %s223
    %v225 = vrsqrt.pop %v224
    %v226 = vmul.f32 %v225, %v224
    %v227 = vmul.f32 %v226, %v225
    %v228 = vmul.f32 0.5, %v227
    %v229 = vsub.f32 1.5, %v228
    %v230 = vmul.f32 %v225, %v229
    %vm231 = vweird.f32 %v224
    %vm232 = vweird.f32 %v225
    %vm233 = vmor %vm231, %vm232
    %v234 = vsel %vm233, %v225, %v230
    %s235 = vtos %v234
    %s236 = smul.f32 %s222, %s235
    %s237 = sld [smem:[#allocation11 + $0x1]]
    %s238 = smul.f32 %s218, %s236
    %s239 = ssub.f32 %s237, %s238
    %v240 = vstv %s236
    %v241 = vmul.f32 %v190, %v240
    %v242 = vmul.f32 %v191, %v240
    %v243 = vstv %s239
    %v244 = vadd.f32 %v241, %v243
    %v245 = vadd.f32 %v242, %v243
    %vm246 = vcmp.ge.f32.partialorder %v244, 0.0
    %vm247 = vcmp.ge.f32.partialorder %v245, 0.0
    %v248 = vmul.f32 %v244, 0.1
    %v249 = vmul.f32 %v245, 0.1
    %v250 = vsel %vm246, %v244, %v248
    %v251 = vsel %vm247, %v245, %v249
    %s252 = sld [smem:[#allocation12]]
    %v253 = vstv %s252
    %v254 = vmul.f32 %v253, %v173
    %v255 = vmul.f32 %v253, %v174
    %s256 = sld [smem:[#allocation12 + $0x1]]
    %v257 = vstv %s256
    %v258 = vmul.f32 %v257, %v173
    %v259 = vmul.f32 %v257, %v174
    %v262 = vrot.slane %v258, 1
    %v263 = vrot.slane %v259, 1
    %v264 = vsel %vm105, %v262, %v263
    %v267 = vadd.f32 %v254, %v264
    %v268 = vadd.f32 %v255, %v263
    %s269 = sld [smem:[#allocation12 + $0x2]]
    %v270 = vstv %s269
    %v271 = vmul.f32 %v270, %v173
    %v272 = vmul.f32 %v270, %v174
    %vm275 = vcmask 1045504
    %v276 = vrot.slane %v271, 2
    %v277 = vrot.slane %v272, 2
    %v278 = vsel %vm275, %v276, %v277
    %v281 = vadd.f32 %v267, %v278
    %v282 = vadd.f32 %v268, %v277
    %s283 = sld [smem:[#allocation12 + $0x80]]
    %v284 = vstv %s283
    %v285 = vmul.f32 %v284, %v250
    %v286 = vmul.f32 %v284, %v251
    %v287 = vadd.f32 %v281, %v285
    %v288 = vadd.f32 %v282, %v286
    %s289 = sld [smem:[#allocation12 + $0x81]]
    %v290 = vstv %s289
    %v291 = vmul.f32 %v290, %v250
    %v292 = vmul.f32 %v290, %v251
    %v295 = vrot.slane %v291, 1
    %v296 = vrot.slane %v292, 1
    %v297 = vsel %vm105, %v295, %v296
    %v300 = vadd.f32 %v287, %v297
    %v301 = vadd.f32 %v288, %v296
    %s302 = sld [smem:[#allocation12 + $0x82]]
    %v303 = vstv %s302
    %v304 = vmul.f32 %v303, %v250
    %v305 = vmul.f32 %v303, %v251
    %v308 = vrot.slane %v304, 2
    %v309 = vrot.slane %v305, 2
    %v310 = vsel %vm275, %v308, %v309
    %v313 = vadd.f32 %v300, %v310
    %v314 = vadd.f32 %v301, %v309
    %v315 = vsel %vm113, %v313, 0.0
    %vm316 = vcmask 258048
    %v317 = vsel %vm316, %v314, 0.0
    %v318 = vadd.f32 %v315, %v317
    %319 = vadd.xlane.f32.xlu0 %v318
    %v320 = vpop.xlane.xlu0 %319
    %v321 = vrot.slane %v320, 4
    %v322 = vadd.f32 %v320, %v321
    %v323 = vrot.slane %v322, 2
    %v324 = vadd.f32 %v322, %v323
    %v325 = vrot.slane %v324, 1
    %v326 = vadd.f32 %v324, %v325
    %s327 = vtos %v326
    %v328 = vmul.f32 %v313, %v313
    %v329 = vmul.f32 %v314, %v314
    %v330 = vsel %vm113, %v328, 0.0
    %v331 = vsel %vm316, %v329, 0.0
    %v332 = vadd.f32 %v330, %v331
    %333 = vadd.xlane.f32.xlu0 %v332
    %v334 = vpop.xlane.xlu0 %333
    %v335 = vrot.slane %v334, 4
    %v336 = vadd.f32 %v334, %v335
    %v337 = vrot.slane %v336, 2
    %v338 = vadd.f32 %v336, %v337
    %v339 = vrot.slane %v338, 1
    %v340 = vadd.f32 %v338, %v339
    %s341 = vtos %v340
    %s342 = smul.f32 %s327, 0.0024038462
    %s343 = smul.f32 %s341, 0.0024038462
    %s344 = smul.f32 %s342, %s342
    %s345 = ssub.f32 %s343, %s344
    %s346 = sld [smem:[#allocation2]]
    %s347 = sadd.f32 %s345, 1e-05
    %v348 = vstv %s347
    %v349 = vrsqrt.pop %v348
    %v350 = vmul.f32 %v349, %v348
    %v351 = vmul.f32 %v350, %v349
    %v352 = vmul.f32 0.5, %v351
    %v353 = vsub.f32 1.5, %v352
    %v354 = vmul.f32 %v349, %v353
    %vm355 = vweird.f32 %v348
    %vm356 = vweird.f32 %v349
    %vm357 = vmor %vm355, %vm356
    %v358 = vsel %vm357, %v349, %v354
    %s359 = vtos %v358
    %s360 = smul.f32 %s346, %s359
    %s361 = sld [smem:[#allocation3]]
    %s362 = smul.f32 %s342, %s360
    %s363 = ssub.f32 %s361, %s362
    %v364 = vstv %s360
    %v365 = vmul.f32 %v313, %v364
    %v366 = vmul.f32 %v314, %v364
    %v367 = vstv %s363
    %v368 = vadd.f32 %v365, %v367
    %v369 = vadd.f32 %v366, %v367
    %vm370 = vcmp.ge.f32.partialorder %v368, 0.0
    %vm371 = vcmp.ge.f32.partialorder %v369, 0.0
    %v372 = vmul.f32 %v368, 0.1
    %v373 = vmul.f32 %v369, 0.1
    %v374 = vsel %vm370, %v368, %v372
    %v375 = vsel %vm371, %v369, %v373
    %376 = vst.msk [vmem:[#allocation14] sm:$0xff] %vm113, %v374
    %377 = vst.msk [vmem:[#allocation14 + $0x8] sm:$0x1f] %vm316, %v375
    // Predicated region
    $region50: #{tpu_custom_call.1} parent=1 // pred_check
      _
    $region51: #{tpu_custom_call.1} parent=1 // pred_check_branch
      %379 = sbr.rel (0) target = $region53
    $region52: #{tpu_custom_call.1} parent=1 // pred_region
      %381 = vsyncadd [#allocation6], 0
      %s382 = sshll.u32 [#allocation14], 4
      %s383 = int_to_ptr.vmem [resolvable:$true] %s382
      %s384 = sshll.u32 %s7, 4
      %s385 = int_to_ptr.hbm [resolvable:$true] %s384
      %390 = dma.vmem_to_hbm [thread:$0]  %s383, 256, %s385, [#allocation6], 128, 128, 8
    $region53: #{tpu_custom_call.1} parent=1 // pred_fallthru
      _
    // Predicated region
    $region54: #{tpu_custom_call.1} parent=1 // pred_check
      _
    $region55: #{tpu_custom_call.1} parent=1 // pred_check_branch
      %392 = sbr.rel (0) target = $region57
    $region56: #{tpu_custom_call.1} parent=1 // pred_region
      %394 = dma.done [#allocation6], 256
    $region57: #{tpu_custom_call.1} parent=1 // pred_fallthru
      _
    %395 = vsyncpa [#allocation5], 1
    %396 = vsyncpa [#allocation6], 1
    %397 = vsyncpa [#allocation7], 1
    %398 = vsyncpa [#allocation10], 1
    %399 = vsyncpa [#allocation13], 1

</llo_original>
